<compile_context>
chip_gen: v7x
topology: tpu7x:2x2x1
jax: 0.10.0
libtpu: 0.0.40
codegen_flags: <defaults>
</compile_context>

<pallas_src>
import functools

import jax
import jax.numpy as jnp
from jax.experimental import pallas as pl
from jax.experimental.pallas import tpu as pltpu


def _round_up(n, m):
    return ((n + m - 1) // m) * m


def _gelu_tanh(x):
    # GELU with tanh approximation, matching torch.nn.GELU(approximate='tanh')
    c = 0.7978845608028654  # sqrt(2/pi)
    return 0.5 * x * (1.0 + jnp.tanh(c * (x + 0.044715 * x * x * x)))


# --------------------------------------------------------------------------
# Kernels
# --------------------------------------------------------------------------
def _mlp_kernel_resident(x_ref, w1_ref, b1_ref, w2_ref, b2_ref, o_ref):
    """Weights fully VMEM-resident; grid = (row tiles,). One pass per tile."""
    h = jnp.dot(x_ref[...], w1_ref[...], preferred_element_type=jnp.float32)
    h = h + b1_ref[...]
    g = _gelu_tanh(h)
    y = jnp.dot(g.astype(w2_ref.dtype), w2_ref[...],
                preferred_element_type=jnp.float32) + b2_ref[...]
    o_ref[...] = y.astype(o_ref.dtype)


def _mlp_kernel_htiled_inplace(x_ref, w1_ref, b1_ref, w2_ref, b2_ref, o_ref):
    """Grid = (row tiles, hidden tiles); f32 output block is the accumulator."""
    h_idx = pl.program_id(1)

    @pl.when(h_idx == 0)
    def _init():
        o_ref[...] = jnp.broadcast_to(b2_ref[...], o_ref.shape)

    h = jnp.dot(x_ref[...], w1_ref[...], preferred_element_type=jnp.float32)
    h = h + b1_ref[...]
    g = _gelu_tanh(h)
    o_ref[...] += jnp.dot(g.astype(w2_ref.dtype), w2_ref[...],
                          preferred_element_type=jnp.float32)


def _mlp_kernel_htiled_scratch(x_ref, w1_ref, b1_ref, w2_ref, b2_ref, o_ref,
                               acc_ref):
    """Grid = (row tiles, hidden tiles); f32 scratch accumulator (non-f32 out)."""
    h_idx = pl.program_id(1)

    @pl.when(h_idx == 0)
    def _init():
        acc_ref[...] = jnp.zeros_like(acc_ref)

    h = jnp.dot(x_ref[...], w1_ref[...], preferred_element_type=jnp.float32)
    h = h + b1_ref[...]
    g = _gelu_tanh(h)
    acc_ref[...] += jnp.dot(g.astype(w2_ref.dtype), w2_ref[...],
                            preferred_element_type=jnp.float32)

    @pl.when(h_idx == pl.num_programs(1) - 1)
    def _finalize():
        o_ref[...] = (acc_ref[...] + b2_ref[...]).astype(o_ref.dtype)


# --------------------------------------------------------------------------
# Tile / VMEM configuration (generation-aware)
# --------------------------------------------------------------------------
_TM_CANDIDATES = (1024, 512, 256, 128, 64, 32, 16, 8)
_TH_CANDIDATES = (1024, 512, 256, 128)


@functools.lru_cache(maxsize=None)
def _vmem_capacity_bytes():
    try:
        return int(pltpu.get_tpu_info().vmem_capacity_bytes)
    except Exception:
        return 64 * 1024 * 1024  # conservative: v7x-sized VMEM


def _choose_config(M, D, H, weight_dtype, out_dtype, tm, th, resident,
                   vmem_limit_bytes):
    w_bytes = jnp.dtype(weight_dtype).itemsize
    o_bytes = jnp.dtype(out_dtype).itemsize

    if vmem_limit_bytes is None:
        cap = _vmem_capacity_bytes()
        # ~100 MiB on 128 MiB parts (v5e/v6e), ~50 MiB on 64 MiB parts (v7x).
        vmem_limit_bytes = min(int(cap * 0.78), 100 * 1024 * 1024)
    budget = int(vmem_limit_bytes * 0.9)  # headroom for compiler scratch

    m8 = _round_up(max(M, 1), 8)
    h128 = _round_up(H, 128)

    # Megacore (v7x has 2 TensorCores): keep >= 2 row tiles when possible so
    # the "parallel" M axis can shard across cores. No cost on 1-TC parts.
    tm_cap = max(8, (m8 // 2) // 8 * 8) if m8 >= 16 else m8

    if tm is None:
        tm_cands = sorted({min(c, tm_cap) for c in _TM_CANDIDATES}, reverse=True)
    else:
        tm_cands = [min(_round_up(tm, 8), m8)]

    def resident_bytes(tm_):
        act = tm_ * D * (w_bytes + o_bytes) * 2      # x + out blocks, dbl-buffered
        wts = 2 * D * H * w_bytes * 2                # W1 + W2 (budget 2x to be safe)
        bias = (H + D) * 4 * 2
        inter = 2 * tm_ * H * 4                      # f32 h / gelu temporaries
        return act + wts + bias + inter

    def htiled_bytes(tm_, th_):
        act = tm_ * D * (w_bytes + o_bytes) * 2
        wts = 2 * D * th_ * w_bytes * 2
        bias = (th_ + D) * 4 * 2
        inter = 2 * tm_ * th_ * 4
        acc = 0 if jnp.dtype(out_dtype) == jnp.dtype(jnp.float32) else tm_ * D * 4
        return act + wts + bias + inter + acc

    # Prefer fully VMEM-resident weights (fetched once per kernel) when they
    # fit in roughly half the budget.
    if resident is None:
        resident = (2 * D * H * w_bytes * 2) <= budget // 2

    if resident:
        for tm_ in tm_cands:
            if resident_bytes(tm_) <= budget:
                return dict(tm=tm_, th=H, resident=True,
                            vmem_limit_bytes=vmem_limit_bytes)
        # Fall through to the H-tiled path if residency does not fit.

    if th is None:
        th_cands = sorted({min(c, h128) for c in _TH_CANDIDATES}, reverse=True)
    else:
        th_cands = [min(_round_up(th, 128), h128)]

    for tm_ in tm_cands:            # biggest row tile first: weight traffic ~ 1/tm
        for th_ in th_cands:
            if htiled_bytes(tm_, th_) <= budget:
                return dict(tm=tm_, th=th_, resident=False,
                            vmem_limit_bytes=vmem_limit_bytes)
    return dict(tm=tm_cands[-1], th=th_cands[-1], resident=False,
                vmem_limit_bytes=vmem_limit_bytes)


# --------------------------------------------------------------------------
# Forward
# --------------------------------------------------------------------------
def prepare_mlp_params(w1, b1, w2, b2, *, weight_dtype=jnp.bfloat16):
    """One-time param prep: hoists the per-call weight cast out of the hot path.

    w1: (D, 4D), w2: (4D, D) (transposes of the torch Linear weights).
    """
    return (jnp.asarray(w1, weight_dtype), jnp.asarray(b1, jnp.float32),
            jnp.asarray(w2, weight_dtype), jnp.asarray(b2, jnp.float32))


@functools.partial(
    jax.jit,
    static_argnames=("tm", "th", "resident", "weight_dtype", "vmem_limit_bytes"))
def _mlp_forward_impl(x, w1, b1, w2, b2, *, tm, th, resident, weight_dtype,
                      vmem_limit_bytes):
    B, T, D = x.shape
    H = w1.shape[1]
    M = B * T
    out_dtype = x.dtype

    # No-ops when params were pre-cast with prepare_mlp_params().
    if w1.dtype != weight_dtype:
        w1 = w1.astype(weight_dtype)
    if w2.dtype != weight_dtype:
        w2 = w2.astype(weight_dtype)

    x2d = x.reshape(M, D)
    if x2d.dtype != weight_dtype:
        # Cast once here (not per hidden step inside the kernel); halves x DMA.
        x2d = x2d.astype(weight_dtype)

    m_pad = _round_up(_round_up(M, 8), tm)
    if m_pad != M:
        x2d = jnp.pad(x2d, ((0, m_pad - M), (0, 0)))

    b2_2d = b2.reshape(1, D).astype(jnp.float32)
    compiler_params = dict(vmem_limit_bytes=vmem_limit_bytes)

    if resident:
        b1_2d = b1.reshape(1, H).astype(jnp.float32)
        out2d = pl.pallas_call(
            _mlp_kernel_resident,
            out_shape=jax.ShapeDtypeStruct((m_pad, D), out_dtype),
            grid_spec=pltpu.PrefetchScalarGridSpec(
                num_scalar_prefetch=0,
                grid=(m_pad // tm,),
                in_specs=[
                    pl.BlockSpec((tm, D), lambda i: (i, 0)),  # x row tile
                    pl.BlockSpec((D, H), lambda i: (0, 0)),   # W1 (resident)
                    pl.BlockSpec((1, H), lambda i: (0, 0)),   # b1 (resident)
                    pl.BlockSpec((H, D), lambda i: (0, 0)),   # W2 (resident)
                    pl.BlockSpec((1, D), lambda i: (0, 0)),   # b2 (resident)
                ],
                out_specs=pl.BlockSpec((tm, D), lambda i: (i, 0)),
            ),
            compiler_params=pltpu.CompilerParams(
                dimension_semantics=("parallel",), **compiler_params),
        )(x2d, w1, b1_2d, w2, b2_2d)
    else:
        h_pad = _round_up(H, th)
        if h_pad != H:  # zero padding of the hidden dim is exact for this math
            w1 = jnp.pad(w1, ((0, 0), (0, h_pad - H)))
            b1 = jnp.pad(b1, (0, h_pad - H))
            w2 = jnp.pad(w2, ((0, h_pad - H), (0, 0)))
        b1_2d = b1.reshape(1, h_pad).astype(jnp.float32)

        if jnp.dtype(out_dtype) == jnp.dtype(jnp.float32):
            kernel, scratch = _mlp_kernel_htiled_inplace, []
        else:
            kernel = _mlp_kernel_htiled_scratch
            scratch = [pltpu.VMEM((tm, D), jnp.float32)]

        out2d = pl.pallas_call(
            kernel,
            out_shape=jax.ShapeDtypeStruct((m_pad, D), out_dtype),
            grid_spec=pltpu.PrefetchScalarGridSpec(
                num_scalar_prefetch=0,
                grid=(m_pad // tm, h_pad // th),
                in_specs=[
                    pl.BlockSpec((tm, D), lambda i, h: (i, 0)),  # x row tile
                    pl.BlockSpec((D, th), lambda i, h: (0, h)),  # W1 slab
                    pl.BlockSpec((1, th), lambda i, h: (0, h)),  # b1 slab
                    pl.BlockSpec((th, D), lambda i, h: (h, 0)),  # W2 slab
                    pl.BlockSpec((1, D), lambda i, h: (0, 0)),   # b2 (invariant)
                ],
                out_specs=pl.BlockSpec((tm, D), lambda i, h: (i, 0)),
                scratch_shapes=scratch,
            ),
            compiler_params=pltpu.CompilerParams(
                dimension_semantics=("parallel", "arbitrary"), **compiler_params),
        )(x2d, w1, b1_2d, w2, b2_2d)

    if m_pad != M:
        out2d = out2d[:M]
    return out2d.reshape(B, T, D)


def mlp_forward(x, w1, b1, w2, b2, *, weight_dtype=jnp.bfloat16, tm=None,
                th=None, resident=None, vmem_limit_bytes=None):
    """x: (B, T, D).  w1: (D, 4D), b1: (4D,), w2: (4D, D), b2: (D,).

    Weights are the transposes of the torch Linear weights. Matmuls run in
    `weight_dtype` (bf16 by default); bias, GELU and cross-hidden accumulation
    are f32. Output keeps x.dtype.
    """
    B, T, D = x.shape
    H = w1.shape[1]
    cfg = _choose_config(B * T, D, H, weight_dtype, x.dtype, tm, th, resident,
                         vmem_limit_bytes)
    return _mlp_forward_impl(x, w1, b1, w2, b2, weight_dtype=weight_dtype, **cfg)


def _reference_mlp(x, w1, b1, w2, b2):
    h = jnp.einsum("btd,dh->bth", x, w1) + b1
    g = _gelu_tanh(h)
    return jnp.einsum("bth,hd->btd", g, w2) + b2


if __name__ == "__main__":
    # Small config consistent with the module: n_embd=32, hidden=4*32=128.
    B, T, D = 2, 8, 32
    H = 4 * D

    key = jax.random.PRNGKey(0)
    kx, kw1, kb1, kw2, kb2 = jax.random.split(key, 5)

    x = jax.random.normal(kx, (B, T, D), dtype=jnp.float32)

    # Deterministic nanoGPT-style init (NANOGPT_SCALE_INIT only affects init).
    w1 = 0.02 * jax.random.normal(kw1, (D, H), dtype=jnp.float32)   # c_fc.weight.T
    b1 = 0.02 * jax.random.normal(kb1, (H,), dtype=jnp.float32)
    w2 = 0.02 * jax.random.normal(kw2, (H, D), dtype=jnp.float32)   # c_proj.weight.T
    b2 = 0.02 * jax.random.normal(kb2, (D,), dtype=jnp.float32)

    ref = _reference_mlp(x, w1, b1, w2, b2)

    # 1) Exact-math path, auto config (weights VMEM-resident) — tight tolerance.
    out = jax.block_until_ready(
        mlp_forward(x, w1, b1, w2, b2, weight_dtype=jnp.float32))
    assert out.shape == (B, T, D)
    assert jnp.allclose(out, ref, atol=1e-5, rtol=1e-5), "resident f32 mismatch"

    # 2) Default fast path: pre-cast bf16 weights (cast hoisted out of the hot
    #    path), bf16 x, f32 accumulation — looser tolerance.
    pw1, pb1, pw2, pb2 = prepare_mlp_params(w1, b1, w2, b2)
    out = jax.block_until_ready(mlp_forward(x, pw1, pb1, pw2, pb2))
    assert out.shape == (B, T, D)
    assert jnp.allclose(out, ref, atol=2e-2, rtol=2e-2), "resident bf16 mismatch"

    # 3) Force the H-tiled reduction path (used when weights don't fit VMEM):
    #    f32 output -> accumulate directly into the output block (no scratch).
    out = jax.block_until_ready(
        mlp_forward(x, w1, b1, w2, b2, weight_dtype=jnp.float32,
                    resident=False, th=128))
    assert jnp.allclose(out, ref, atol=1e-5, rtol=1e-5), "h-tiled f32 mismatch"

    # 4) H-tiled path with a non-f32 output dtype -> f32 scratch accumulator.
    out = jax.block_until_ready(
        mlp_forward(x.astype(jnp.bfloat16), pw1, pb1, pw2, pb2,
                    resident=False, th=128))
    assert jnp.allclose(out.astype(jnp.float32), ref, atol=3e-2, rtol=3e-2), \
        "h-tiled bf16 mismatch"

    print("KERNEL_OK")
</pallas_src>

<mosaic_0001>
module attributes {stable_mosaic.version = 11 : i64} {
  func.func @_mlp_kernel_resident(%arg0: i32, %arg1: memref<8x32xf32, #tpu.memory_space<vmem>>, %arg2: memref<32x128xf32, #tpu.memory_space<vmem>>, %arg3: memref<1x128xf32, #tpu.memory_space<vmem>>, %arg4: memref<128x32xf32, #tpu.memory_space<vmem>>, %arg5: memref<1x32xf32, #tpu.memory_space<vmem>>, %arg6: memref<8x32xf32, #tpu.memory_space<vmem>>) attributes {dimension_semantics = [#tpu.dimension_semantics<parallel>], iteration_bounds = array<i64: 2>, scalar_prefetch = 0 : i64, scratch_operands = 0 : i64, tpu.core_type = #tpu.core_type<tc>, window_params = [{transform_indices = @transform_0, window_bounds = array<i64: 8, 32>}, {pipeline_mode = #tpu.pipeline_mode<synchronous>, transform_indices = @transform_1, window_bounds = array<i64: 32, 128>}, {pipeline_mode = #tpu.pipeline_mode<synchronous>, transform_indices = @transform_2, window_bounds = array<i64: 1, 128>}, {pipeline_mode = #tpu.pipeline_mode<synchronous>, transform_indices = @transform_3, window_bounds = array<i64: 128, 32>}, {pipeline_mode = #tpu.pipeline_mode<synchronous>, transform_indices = @transform_4, window_bounds = array<i64: 1, 32>}, {transform_indices = @transform_5, window_bounds = array<i64: 8, 32>}]} {
    %c0 = arith.constant 0 : index
    %c0_0 = arith.constant 0 : index
    %0 = vector.load %arg1[%c0, %c0_0] : memref<8x32xf32, #tpu.memory_space<vmem>>, vector<8x32xf32>
    %c0_1 = arith.constant 0 : index
    %c0_2 = arith.constant 0 : index
    %1 = vector.load %arg2[%c0_1, %c0_2] : memref<32x128xf32, #tpu.memory_space<vmem>>, vector<32x128xf32>
    %cst = arith.constant dense<0.000000e+00> : vector<8x128xf32>
    %2 = tpu.matmul %0, %1, %cst {dimension_numbers = #tpu.dot_dimension_numbers<[1], [0], [0], [1], [0, 0, 1, 1], [], []>} : vector<8x32xf32>, vector<32x128xf32>, vector<8x128xf32> -> vector<8x128xf32>
    %c0_3 = arith.constant 0 : index
    %c0_4 = arith.constant 0 : index
    %3 = vector.load %arg3[%c0_3, %c0_4] : memref<1x128xf32, #tpu.memory_space<vmem>>, vector<1x128xf32>
    %4 = vector.broadcast %3 : vector<1x128xf32> to vector<8x128xf32>
    %5 = arith.addf %2, %4 : vector<8x128xf32>
    %cst_5 = arith.constant 5.000000e-01 : f32
    %6 = vector.broadcast %cst_5 : f32 to vector<8x128xf32>
    %7 = arith.mulf %6, %5 : vector<8x128xf32>
    %cst_6 = arith.constant 4.471500e-02 : f32
    %8 = vector.broadcast %cst_6 : f32 to vector<8x128xf32>
    %9 = arith.mulf %8, %5 : vector<8x128xf32>
    %10 = arith.mulf %9, %5 : vector<8x128xf32>
    %11 = arith.mulf %10, %5 : vector<8x128xf32>
    %12 = arith.addf %5, %11 : vector<8x128xf32>
    %cst_7 = arith.constant 0.797884583 : f32
    %13 = vector.broadcast %cst_7 : f32 to vector<8x128xf32>
    %14 = arith.mulf %13, %12 : vector<8x128xf32>
    %15 = math.tanh %14 : vector<8x128xf32>
    %cst_8 = arith.constant 1.000000e+00 : f32
    %16 = vector.broadcast %cst_8 : f32 to vector<8x128xf32>
    %17 = arith.addf %16, %15 : vector<8x128xf32>
    %18 = arith.mulf %7, %17 : vector<8x128xf32>
    %c0_9 = arith.constant 0 : index
    %c0_10 = arith.constant 0 : index
    %19 = vector.load %arg4[%c0_9, %c0_10] : memref<128x32xf32, #tpu.memory_space<vmem>>, vector<128x32xf32>
    %cst_11 = arith.constant dense<0.000000e+00> : vector<8x32xf32>
    %20 = tpu.matmul %18, %19, %cst_11 {dimension_numbers = #tpu.dot_dimension_numbers<[1], [0], [0], [1], [0, 0, 1, 1], [], []>} : vector<8x128xf32>, vector<128x32xf32>, vector<8x32xf32> -> vector<8x32xf32>
    %c0_12 = arith.constant 0 : index
    %c0_13 = arith.constant 0 : index
    %21 = vector.load %arg5[%c0_12, %c0_13] : memref<1x32xf32, #tpu.memory_space<vmem>>, vector<1x32xf32>
    %22 = vector.broadcast %21 : vector<1x32xf32> to vector<8x32xf32>
    %23 = arith.addf %20, %22 : vector<8x32xf32>
    %c0_14 = arith.constant 0 : index
    %c0_15 = arith.constant 0 : index
    %24 = vector.load %arg6[%c0_14, %c0_15] : memref<8x32xf32, #tpu.memory_space<vmem>>, vector<8x32xf32>
    tpu.vector_store %arg6[%c0_14, %c0_15], %23 {strides = array<i32>} : memref<8x32xf32, #tpu.memory_space<vmem>>, vector<8x32xf32>,
    return
  }
  func.func @transform_0(%arg0: i32) -> (i32, i32) {
    %c0_i32 = arith.constant 0 : i32
    %c0_i32_0 = arith.constant 0 : i32
    return %arg0, %c0_i32 : i32, i32
  }
  func.func @transform_1(%arg0: i32) -> (i32, i32) {
    %c0_i32 = arith.constant 0 : i32
    %c0_i32_0 = arith.constant 0 : i32
    %c0_i32_1 = arith.constant 0 : i32
    return %c0_i32, %c0_i32_0 : i32, i32
  }
  func.func @transform_2(%arg0: i32) -> (i32, i32) {
    %c0_i32 = arith.constant 0 : i32
    %c0_i32_0 = arith.constant 0 : i32
    %c0_i32_1 = arith.constant 0 : i32
    return %c0_i32, %c0_i32_0 : i32, i32
  }
  func.func @transform_3(%arg0: i32) -> (i32, i32) {
    %c0_i32 = arith.constant 0 : i32
    %c0_i32_0 = arith.constant 0 : i32
    %c0_i32_1 = arith.constant 0 : i32
    return %c0_i32, %c0_i32_0 : i32, i32
  }
  func.func @transform_4(%arg0: i32) -> (i32, i32) {
    %c0_i32 = arith.constant 0 : i32
    %c0_i32_0 = arith.constant 0 : i32
    %c0_i32_1 = arith.constant 0 : i32
    return %c0_i32, %c0_i32_0 : i32, i32
  }
  func.func @transform_5(%arg0: i32) -> (i32, i32) {
    %c0_i32 = arith.constant 0 : i32
    %c0_i32_0 = arith.constant 0 : i32
    return %arg0, %c0_i32 : i32, i32
  }
}

</mosaic_0001>

<llo_original>
// kernel: _mlp_forward_impl.1
$region0: #{_mlp_forward_impl.1}
  #allocation0 [shape = 'u32[]', space=smem, size = 0x4, offset = 0x4, fixed_abs, tag = 'smem constant byte address 0x4 - core index']
  #allocation1 [shape = 'u32[144,128]{1,0:T(1,128)}', space=vmem, size = 0x12000, scoped, tag = 'internal scratch']
  %s0 = inlined_call_operand.vmem [shape: f32[16,32], index: 0, kind: input, shape index: {}]
  %s1 = inlined_call_operand.vmem [shape: f32[32,128], index: 1, kind: input, shape index: {}]
  %s2 = inlined_call_operand.vmem [shape: f32[1,128], index: 2, kind: input, shape index: {}]
  %s3 = inlined_call_operand.vmem [shape: f32[128,32], index: 3, kind: input, shape index: {}]
  %s4 = inlined_call_operand.vmem [shape: f32[1,32], index: 4, kind: input, shape index: {}]
  %s5 = inlined_call_operand.hbm [shape: f32[16,32], index: 5, kind: output, shape index: {}]
  %s6 = sld [smem:[#allocation0]]
  $region53: #{_mlp_forward_impl.1} parent=0
    _
  %s8 = ssub.s32 1, %s6
  %s9 = scalar_select 0, %s8, %s6
  $region1: #{_mlp_forward_impl.1} parent=0
    #allocation2 [shape = 'u8[8192]{0}', space=vmem, size = 0x2000, scoped, tag = 'output window, operand 0']
    #allocation3 [shape = 's32[2]{0}', space=sflag, size = 0x8, scoped, tag = 'scoped memory for _mlp_forward_impl.1']
    %10 = vsyncpa [#allocation3], 0
    %s11 = scalar_lea.sflag [#allocation3], 1
    %12 = vsyncpa %s11, 0
    loop: start=0, step=1, limit=4
    $region2: #{_mlp_forward_impl.1} parent=1 // loop_pre_header
      _
    $region3: #{_mlp_forward_impl.1} parent=1 // loop_header
      %s14 = sphi 0, %s18
      %p15 = scmp.ge.s32.totalorder %s14, 4
      %s24 = sphi 0, %s26
      %s27 = sphi 0, %s24
      %s28 = sphi 0, %s27
      %s44 = sphi 0, %s28
      %s48 = sphi 0, %s48
      %s50 = sphi 0, %s48
      %s51 = sphi 0, %s50
      %s65 = sphi 0, %s51
      %s69 = sphi 0, %s69
      %s71 = sphi 0, %s69
      %s72 = sphi 0, %s71
      %s86 = sphi 0, %s72
      %s90 = sphi 0, %s90
      %s92 = sphi 0, %s90
      %s93 = sphi 0, %s92
      %s107 = sphi 0, %s93
      %s111 = sphi 0, %s111
      %s113 = sphi 0, %s111
      %s114 = sphi 0, %s113
      %s128 = sphi 0, %s114
      %s134 = sphi 0, %s136
      %s137 = sphi 0, %s134
      %s138 = sphi 0, %s137
      %s154 = sphi 0, %s138
    $region4: #{_mlp_forward_impl.1} parent=1 // loop_header_branch
      %17 = sbr.rel (%p15) target = $region8
    $region5: #{_mlp_forward_impl.1} parent=1 // loop_body
      %s19 = ssub.s32 %s14, 1
      %s20 = ssub.s32 %s14, 2
      %s21 = sadd.s32 %s14, 1
      %s22 = ssub.s32 %s14, %s21
      %p23 = scmp.eq.s32.totalorder %s22, 0
      %s25 = sadd.s32 %s24, 1
      %s26 = scalar_select %p23, %s24, %s25
      %p29 = pneg %p23
      %p30 = scmp.eq.s32.totalorder %s14, 1
      %p31 = por %p29, %p30
      %p32 = scmp.ne.s32.totalorder %s24, %s27
      %p33 = scmp.eq.s32.totalorder %s14, 0
      %p34 = por %p32, %p33
      %p35 = scmp.ne.s32.totalorder %s24, %s27
      %p36 = scmp.eq.s32.totalorder %s19, 1
      %p37 = por %p35, %p36
      %p38 = scmp.ne.s32.totalorder %s27, %s28
      %p39 = scmp.eq.s32.totalorder %s19, 0
      %p40 = por %p38, %p39
      %p41 = scmp.ne.s32.totalorder %s27, %s28
      %p42 = scmp.eq.s32.totalorder %s20, 1
      %p43 = por %p41, %p42
      %p45 = scmp.ne.s32.totalorder %s28, %s44
      %p46 = scmp.eq.s32.totalorder %s20, 0
      %p47 = por %p45, %p46
      %s49 = sadd.s32 %s48, 1
      %p52 = scmp.eq.s32.totalorder %s14, 1
      %p53 = scmp.ne.s32.totalorder %s48, %s50
      %p54 = scmp.eq.s32.totalorder %s14, 0
      %p55 = por %p53, %p54
      %p56 = scmp.ne.s32.totalorder %s48, %s50
      %p57 = scmp.eq.s32.totalorder %s19, 1
      %p58 = por %p56, %p57
      %p59 = scmp.ne.s32.totalorder %s50, %s51
      %p60 = scmp.eq.s32.totalorder %s19, 0
      %p61 = por %p59, %p60
      %p62 = scmp.ne.s32.totalorder %s50, %s51
      %p63 = scmp.eq.s32.totalorder %s20, 1
      %p64 = por %p62, %p63
      %p66 = scmp.ne.s32.totalorder %s51, %s65
      %p67 = scmp.eq.s32.totalorder %s20, 0
      %p68 = por %p66, %p67
      %s70 = sadd.s32 %s69, 1
      %p73 = scmp.eq.s32.totalorder %s14, 1
      %p74 = scmp.ne.s32.totalorder %s69, %s71
      %p75 = scmp.eq.s32.totalorder %s14, 0
      %p76 = por %p74, %p75
      %p77 = scmp.ne.s32.totalorder %s69, %s71
      %p78 = scmp.eq.s32.totalorder %s19, 1
      %p79 = por %p77, %p78
      %p80 = scmp.ne.s32.totalorder %s71, %s72
      %p81 = scmp.eq.s32.totalorder %s19, 0
      %p82 = por %p80, %p81
      %p83 = scmp.ne.s32.totalorder %s71, %s72
      %p84 = scmp.eq.s32.totalorder %s20, 1
      %p85 = por %p83, %p84
      %p87 = scmp.ne.s32.totalorder %s72, %s86
      %p88 = scmp.eq.s32.totalorder %s20, 0
      %p89 = por %p87, %p88
      %s91 = sadd.s32 %s90, 1
      %p94 = scmp.eq.s32.totalorder %s14, 1
      %p95 = scmp.ne.s32.totalorder %s90, %s92
      %p96 = scmp.eq.s32.totalorder %s14, 0
      %p97 = por %p95, %p96
      %p98 = scmp.ne.s32.totalorder %s90, %s92
      %p99 = scmp.eq.s32.totalorder %s19, 1
      %p100 = por %p98, %p99
      %p101 = scmp.ne.s32.totalorder %s92, %s93
      %p102 = scmp.eq.s32.totalorder %s19, 0
      %p103 = por %p101, %p102
      %p104 = scmp.ne.s32.totalorder %s92, %s93
      %p105 = scmp.eq.s32.totalorder %s20, 1
      %p106 = por %p104, %p105
      %p108 = scmp.ne.s32.totalorder %s93, %s107
      %p109 = scmp.eq.s32.totalorder %s20, 0
      %p110 = por %p108, %p109
      %s112 = sadd.s32 %s111, 1
      %p115 = scmp.eq.s32.totalorder %s14, 1
      %p116 = scmp.ne.s32.totalorder %s111, %s113
      %p117 = scmp.eq.s32.totalorder %s14, 0
      %p118 = por %p116, %p117
      %p119 = scmp.ne.s32.totalorder %s111, %s113
      %p120 = scmp.eq.s32.totalorder %s19, 1
      %p121 = por %p119, %p120
      %p122 = scmp.ne.s32.totalorder %s113, %s114
      %p123 = scmp.eq.s32.totalorder %s19, 0
      %p124 = por %p122, %p123
      %p125 = scmp.ne.s32.totalorder %s113, %s114
      %p126 = scmp.eq.s32.totalorder %s20, 1
      %p127 = por %p125, %p126
      %p129 = scmp.ne.s32.totalorder %s114, %s128
      %p130 = scmp.eq.s32.totalorder %s20, 0
      %p131 = por %p129, %p130
      %s132 = ssub.s32 %s14, %s21
      %p133 = scmp.eq.s32.totalorder %s132, 0
      %s135 = sadd.s32 %s134, 1
      %s136 = scalar_select %p133, %s134, %s135
      %p139 = pneg %p133
      %p140 = scmp.eq.s32.totalorder %s14, 1
      %p141 = por %p139, %p140
      %p142 = scmp.ne.s32.totalorder %s134, %s137
      %p143 = scmp.eq.s32.totalorder %s14, 0
      %p144 = por %p142, %p143
      %p145 = scmp.ne.s32.totalorder %s134, %s137
      %p146 = scmp.eq.s32.totalorder %s19, 1
      %p147 = por %p145, %p146
      %p148 = scmp.ne.s32.totalorder %s137, %s138
      %p149 = scmp.eq.s32.totalorder %s19, 0
      %p150 = por %p148, %p149
      %p151 = scmp.ne.s32.totalorder %s137, %s138
      %p152 = scmp.eq.s32.totalorder %s20, 1
      %p153 = por %p151, %p152
      %p155 = scmp.ne.s32.totalorder %s138, %s154
      %p156 = scmp.eq.s32.totalorder %s20, 0
      %p157 = por %p155, %p156
      %p158 = scmp.le.s32.totalorder 1, %s14
      %p159 = scmp.lt.s32.totalorder %s14, 3
      %p160 = pnand %p158, %p159
      %p161 = pneg %p160
      // Predicated region
      $region9: #{_mlp_forward_impl.1} parent=5 // pred_check
        _
      $region10: #{_mlp_forward_impl.1} parent=5 // pred_check_branch
        %163 = sbr.rel (%p160) target = $region12
      $region11: #{_mlp_forward_impl.1} parent=5 // pred_region
        %s164 = ssub.s32 %s14, 1
        // Predicated region
        $region13: #{_mlp_forward_impl.1} parent=11 // pred_check
          %p165 = pneg %p61
        $region14: #{_mlp_forward_impl.1} parent=11 // pred_check_branch
          %167 = sbr.rel (%p165) target = $region16
        $region15: #{_mlp_forward_impl.1} parent=11 // pred_region
          _
        $region16: #{_mlp_forward_impl.1} parent=11 // pred_fallthru
          _
        // Predicated region
        $region17: #{_mlp_forward_impl.1} parent=11 // pred_check
          %p168 = pneg %p82
        $region18: #{_mlp_forward_impl.1} parent=11 // pred_check_branch
          %170 = sbr.rel (%p168) target = $region20
        $region19: #{_mlp_forward_impl.1} parent=11 // pred_region
          _
        $region20: #{_mlp_forward_impl.1} parent=11 // pred_fallthru
          _
        // Predicated region
        $region21: #{_mlp_forward_impl.1} parent=11 // pred_check
          %p171 = pneg %p103
        $region22: #{_mlp_forward_impl.1} parent=11 // pred_check_branch
          %173 = sbr.rel (%p171) target = $region24
        $region23: #{_mlp_forward_impl.1} parent=11 // pred_region
          _
        $region24: #{_mlp_forward_impl.1} parent=11 // pred_fallthru
          _
        // Predicated region
        $region25: #{_mlp_forward_impl.1} parent=11 // pred_check
          %p174 = pneg %p124
        $region26: #{_mlp_forward_impl.1} parent=11 // pred_check_branch
          %176 = sbr.rel (%p174) target = $region28
        $region27: #{_mlp_forward_impl.1} parent=11 // pred_region
          _
        $region28: #{_mlp_forward_impl.1} parent=11 // pred_fallthru
          _
      $region12: #{_mlp_forward_impl.1} parent=5 // pred_fallthru
        _
      %p177 = scmp.lt.s32.totalorder %s14, 2
      // Predicated region
      $region29: #{_mlp_forward_impl.1} parent=5 // pred_check
        %p178 = pneg %p177
      $region30: #{_mlp_forward_impl.1} parent=5 // pred_check_branch
        %180 = sbr.rel (%p178) target = $region32
      $region31: #{_mlp_forward_impl.1} parent=5 // pred_region
        // Predicated region
        $region33: #{_mlp_forward_impl.1} parent=31 // pred_check
          %p181 = pneg %p34
        $region34: #{_mlp_forward_impl.1} parent=31 // pred_check_branch
          %183 = sbr.rel (%p181) target = $region36
        $region35: #{_mlp_forward_impl.1} parent=31 // pred_region
          %p184 = scmp.lt.s32.totalorder %s14, 1
          %s185 = scalar_select %p184, %s14, 1
          %s186 = smul.addr %s185, 8
          %s187 = scalar_lea.vmem %s0, %s186
        $region36: #{_mlp_forward_impl.1} parent=31 // pred_fallthru
          _
      $region32: #{_mlp_forward_impl.1} parent=5 // pred_fallthru
        _
      %p188 = scmp.le.s32.totalorder 1, %s14
      %p189 = scmp.lt.s32.totalorder %s14, 3
      %p190 = pnand %p188, %p189
      %p191 = pneg %p190
      // Predicated region
      $region37: #{_mlp_forward_impl.1} parent=5 // pred_check
        _
      $region38: #{_mlp_forward_impl.1} parent=5 // pred_check_branch
        %193 = sbr.rel (%p190) target = $region40
      $region39: #{_mlp_forward_impl.1} parent=5 // pred_region
        %s194 = ssub.s32 %s14, 1
        %p195 = scmp.lt.s32.totalorder %s19, 1
        %s196 = scalar_select %p195, %s19, 1
        %s197 = smul.addr %s196, 8
        %s198 = scalar_lea.vmem %s0, %s197
        %p199 = pneg %p40
        %p200 = pneg %p37
        %p201 = pneg %p61
        %p202 = pneg %p58
        %p203 = pneg %p82
        %p204 = pneg %p79
        %p205 = pneg %p103
        %p206 = pneg %p100
        %p207 = pneg %p124
        %p208 = pneg %p121
        %p209 = pneg %p150
        %p210 = pneg %p147
        %s211 = sand.u32 %s137, 1
        %s212 = scalar_lea.sflag [#allocation3], %s211
        %s213 = sand.u32 %s137, 1
        %s214 = smul.addr %s213, 8
        %s215 = scalar_lea.vmem [#allocation2], %s214
        %p216 = scmp.lt.s32.totalorder %s19, 1
        %s217 = scalar_select %p216, %s19, 1
        %s218 = smul.addr %s217, 8
        %s219 = scalar_lea.vmem %s0, %s218
        %v220 = vld [vmem:[%s219] sm:$0xff]
        %v221 = vld [vmem:[%s1] sm:$0xff]
        %v222 = vld [vmem:[%s1 + $0x8] sm:$0xff]
        %v223 = vld [vmem:[%s1 + $0x10] sm:$0xff]
        %v224 = vld [vmem:[%s1 + $0x18] sm:$0xff]
        %v225 = vld [vmem:[%s2] sm:$0x1]
        %v227 = vlaneseq
        %v228 = vshrl.u32 %v227, 7
        %v229 = vsub.s32 0, %v228
        %v230 = vrot.slane %v225, %v229
        %vm232 = vcmask 261120
        %v234 = vsel %vm232, %v220, 0
        %236 = vmatprep.subr.mxu0 0.0
        %237 = vmatpush1.msra.mxu0 %v221
        %238 = vmatprep.subr.mxu0 0.0
        %239 = vmatpush1.msra.mxu0 %v222
        %240 = vmatprep.subr.mxu0 0.0
        %241 = vmatpush1.msra.mxu0 %v223
        %242 = vmatprep.subr.mxu0 0.0
        %243 = vmatpush1.msra.mxu0 %v224
        %244 = vmatprep.subr.mxu0 0.0
        %245 = vmatpush1.msra.mxu0 0.0
        %246 = vmatprep.subr.mxu0 0.0
        %247 = vmatpush1.msra.mxu0 0.0
        %248 = vmatprep.subr.mxu0 0.0
        %249 = vmatpush1.msra.mxu0 0.0
        %250 = vmatprep.subr.mxu0 0.0
        %251 = vmatpush1.msra.mxu0 0.0
        %252 = vmatprep.subr.mxu0 0.0
        %253 = vmatpush1.msra.mxu0 0.0
        %254 = vmatprep.subr.mxu0 0.0
        %255 = vmatpush1.msra.mxu0 0.0
        %256 = vmatprep.subr.mxu0 0.0
        %257 = vmatpush1.msra.mxu0 0.0
        %258 = vmatprep.subr.mxu0 0.0
        %259 = vmatpush1.msra.mxu0 0.0
        %260 = vmatprep.subr.mxu0 0.0
        %261 = vmatpush1.msra.mxu0 0.0
        %262 = vmatprep.subr.mxu0 0.0
        %263 = vmatpush1.msra.mxu0 0.0
        %264 = vmatprep.subr.mxu0 0.0
        %265 = vmatpush1.msra.mxu0 0.0
        %266 = vmatprep.subr.mxu0 0.0
        %267 = vmatpush1.msra.mxu0 0.0
        %268 = vmatprep.subr.mxu0 0.0
        %269 = vmatpush1.msra.mxu0 0.0
        %270 = vmatprep.subr.mxu0 0.0
        %271 = vmatpush1.msra.mxu0 0.0
        %272 = vmatprep.subr.mxu0 0.0
        %273 = vmatpush1.msra.mxu0 0.0
        %274 = vmatprep.subr.mxu0 0.0
        %275 = vmatpush1.msra.mxu0 0.0
        %276 = vmatprep.subr.mxu0 0.0
        %277 = vmatpush1.msra.mxu0 0.0
        %278 = vmatprep.subr.mxu0 0.0
        %279 = vmatpush1.msra.mxu0 0.0
        %280 = vmatprep.subr.mxu0 0.0
        %281 = vmatpush1.msra.mxu0 0.0
        %282 = vmatprep.subr.mxu0 0.0
        %283 = vmatpush1.msra.mxu0 0.0
        %284 = vmatprep.subr.mxu0 0.0
        %285 = vmatpush1.msra.mxu0 0.0
        %286 = vmatprep.subr.mxu0 0.0
        %287 = vmatpush1.msra.mxu0 0.0
        %288 = vmatprep.subr.mxu0 0.0
        %289 = vmatpush1.msra.mxu0 0.0
        %290 = vmatprep.subr.mxu0 0.0
        %291 = vmatpush1.msra.mxu0 0.0
        %292 = vmatprep.subr.mxu0 0.0
        %293 = vmatpush1.msra.mxu0 0.0
        %294 = vmatprep.subr.mxu0 0.0
        %295 = vmatpush1.msra.mxu0 0.0
        %296 = vmatprep.subr.mxu0 0.0
        %297 = vmatpush1.msra.mxu0 0.0
        %298 = vmatprep.subr.mxu0 0.0
        %299 = vmatpush1.msra.mxu0 0.0
        %300 = vmatprep.mubr.f32.mxu0 0.0
        %301 = vmatmul.mubr.f32.gmra.mrb[0].mxu0 %v234
        %v302 = vpop.f32.mrb[0].mxu0
        %v303 = vadd.f32 %v230, %v302
        %v304 = vpop.f32.mrb[0].mxu0
        %305 = vdwg.mxu0
        %v306 = vmul.f32 %v303, 0.5
        %v307 = vmul.f32 %v303, 0.044715
        %v308 = vmul.f32 %v307, %v303
        %v309 = vmul.f32 %v308, %v303
        %v310 = vadd.f32 %v303, %v309
        %v311 = vmul.f32 %v310, 0.7978846
        %v312 = vtanh.pop %v311
        %v313 = vadd.f32 %v312, 1.0
        %v314 = vmul.f32 %v306, %v313
        %v315 = vld [vmem:[%s3] sm:$0xff]
        %v316 = vld [vmem:[%s3 + $0x8] sm:$0xff]
        %v317 = vld [vmem:[%s3 + $0x10] sm:$0xff]
        %v318 = vld [vmem:[%s3 + $0x18] sm:$0xff]
        %v319 = vld [vmem:[%s3 + $0x20] sm:$0xff]
        %v320 = vld [vmem:[%s3 + $0x28] sm:$0xff]
        %v321 = vld [vmem:[%s3 + $0x30] sm:$0xff]
        %v322 = vld [vmem:[%s3 + $0x38] sm:$0xff]
        %v323 = vld [vmem:[%s3 + $0x40] sm:$0xff]
        %v324 = vld [vmem:[%s3 + $0x48] sm:$0xff]
        %v325 = vld [vmem:[%s3 + $0x50] sm:$0xff]
        %v326 = vld [vmem:[%s3 + $0x58] sm:$0xff]
        %v327 = vld [vmem:[%s3 + $0x60] sm:$0xff]
        %v328 = vld [vmem:[%s3 + $0x68] sm:$0xff]
        %v329 = vld [vmem:[%s3 + $0x70] sm:$0xff]
        %v330 = vld [vmem:[%s3 + $0x78] sm:$0xff]
        %v331 = vld [vmem:[%s4] sm:$0x1]
        %v333 = vlaneseq
        %v334 = vshrl.u32 %v333, 7
        %v335 = vsub.s32 0, %v334
        %v336 = vrot.slane %v331, %v335
        %338 = vmatprep.subr.mxu0 0.0
        %339 = vmatpush1.msra.mxu0 %v315
        %340 = vmatprep.subr.mxu0 0.0
        %341 = vmatpush1.msra.mxu0 %v316
        %342 = vmatprep.subr.mxu0 0.0
        %343 = vmatpush1.msra.mxu0 %v317
        %344 = vmatprep.subr.mxu0 0.0
        %345 = vmatpush1.msra.mxu0 %v318
        %346 = vmatprep.subr.mxu0 0.0
        %347 = vmatpush1.msra.mxu0 %v319
        %348 = vmatprep.subr.mxu0 0.0
        %349 = vmatpush1.msra.mxu0 %v320
        %350 = vmatprep.subr.mxu0 0.0
        %351 = vmatpush1.msra.mxu0 %v321
        %352 = vmatprep.subr.mxu0 0.0
        %353 = vmatpush1.msra.mxu0 %v322
        %354 = vmatprep.subr.mxu0 0.0
        %355 = vmatpush1.msra.mxu0 %v323
        %356 = vmatprep.subr.mxu0 0.0
        %357 = vmatpush1.msra.mxu0 %v324
        %358 = vmatprep.subr.mxu0 0.0
        %359 = vmatpush1.msra.mxu0 %v325
        %360 = vmatprep.subr.mxu0 0.0
        %361 = vmatpush1.msra.mxu0 %v326
        %362 = vmatprep.subr.mxu0 0.0
        %363 = vmatpush1.msra.mxu0 %v327
        %364 = vmatprep.subr.mxu0 0.0
        %365 = vmatpush1.msra.mxu0 %v328
        %366 = vmatprep.subr.mxu0 0.0
        %367 = vmatpush1.msra.mxu0 %v329
        %368 = vmatprep.subr.mxu0 0.0
        %369 = vmatpush1.msra.mxu0 %v330
        %370 = vmatprep.subr.mxu0 0.0
        %371 = vmatpush1.msra.mxu0 0.0
        %372 = vmatprep.subr.mxu0 0.0
        %373 = vmatpush1.msra.mxu0 0.0
        %374 = vmatprep.subr.mxu0 0.0
        %375 = vmatpush1.msra.mxu0 0.0
        %376 = vmatprep.subr.mxu0 0.0
        %377 = vmatpush1.msra.mxu0 0.0
        %378 = vmatprep.subr.mxu0 0.0
        %379 = vmatpush1.msra.mxu0 0.0
        %380 = vmatprep.subr.mxu0 0.0
        %381 = vmatpush1.msra.mxu0 0.0
        %382 = vmatprep.subr.mxu0 0.0
        %383 = vmatpush1.msra.mxu0 0.0
        %384 = vmatprep.subr.mxu0 0.0
        %385 = vmatpush1.msra.mxu0 0.0
        %386 = vmatprep.subr.mxu0 0.0
        %387 = vmatpush1.msra.mxu0 0.0
        %388 = vmatprep.subr.mxu0 0.0
        %389 = vmatpush1.msra.mxu0 0.0
        %390 = vmatprep.subr.mxu0 0.0
        %391 = vmatpush1.msra.mxu0 0.0
        %392 = vmatprep.subr.mxu0 0.0
        %393 = vmatpush1.msra.mxu0 0.0
        %394 = vmatprep.subr.mxu0 0.0
        %395 = vmatpush1.msra.mxu0 0.0
        %396 = vmatprep.subr.mxu0 0.0
        %397 = vmatpush1.msra.mxu0 0.0
        %398 = vmatprep.subr.mxu0 0.0
        %399 = vmatpush1.msra.mxu0 0.0
        %400 = vmatprep.subr.mxu0 0.0
        %401 = vmatpush1.msra.mxu0 0.0
        %402 = vmatprep.mubr.f32.mxu0 0.0
        %403 = vmatmul.mubr.f32.gmra.mrb[0].mxu0 %v314
        %v404 = vpop.f32.mrb[0].mxu0
        %v405 = vadd.f32 %v336, %v404
        %v406 = vpop.f32.mrb[0].mxu0
        %407 = vdwg.mxu0
        %408 = vst.msk [vmem:[%s215] sm:$0xff] %vm232, %v405
        %s409 = sand.u32 %s137, 1
        %s410 = scalar_lea.sflag [#allocation3], %s409
        %s411 = sand.u32 %s137, 1
        %s412 = smul.addr %s411, 8
        %s413 = scalar_lea.vmem [#allocation2], %s412
        // Predicated region
        $region41: #{_mlp_forward_impl.1} parent=39 // pred_check
          %p414 = pneg %p147
        $region42: #{_mlp_forward_impl.1} parent=39 // pred_check_branch
          %416 = sbr.rel (%p414) target = $region44
        $region43: #{_mlp_forward_impl.1} parent=39 // pred_region
          %s418 = ssub.s32 128, 128
          %419 = vsyncadd %s410, %s418
          %s420 = smul.addr %s19, 128
          %s421 = scalar_lea.hbm %s5, %s420
          %s423 = sshll.u32 %s413, 4
          %s424 = int_to_ptr.vmem [resolvable:$true] %s423
          %426 = dma.vmem_to_hbm [thread:$0]  %s424, 128, %s421, %s410
        $region44: #{_mlp_forward_impl.1} parent=39 // pred_fallthru
          _
      $region40: #{_mlp_forward_impl.1} parent=5 // pred_fallthru
        _
      %p427 = scmp.le.s32.totalorder 2, %s14
      // Predicated region
      $region45: #{_mlp_forward_impl.1} parent=5 // pred_check
        %p428 = pneg %p427
      $region46: #{_mlp_forward_impl.1} parent=5 // pred_check_branch
        %430 = sbr.rel (%p428) target = $region48
      $region47: #{_mlp_forward_impl.1} parent=5 // pred_region
        %s431 = ssub.s32 %s14, 2
        // Predicated region
        $region49: #{_mlp_forward_impl.1} parent=47 // pred_check
          %p432 = pneg %p153
        $region50: #{_mlp_forward_impl.1} parent=47 // pred_check_branch
          %434 = sbr.rel (%p432) target = $region52
        $region51: #{_mlp_forward_impl.1} parent=47 // pred_region
          %s435 = sand.u32 %s138, 1
          %s436 = scalar_lea.sflag [#allocation3], %s435
          %s437 = sand.u32 %s138, 1
          %s438 = smul.addr %s437, 8
          %s439 = scalar_lea.vmem [#allocation2], %s438
          %440 = dma.done %s436, 128
        $region52: #{_mlp_forward_impl.1} parent=47 // pred_fallthru
          _
      $region48: #{_mlp_forward_impl.1} parent=5 // pred_fallthru
        _
    $region6: #{_mlp_forward_impl.1} parent=1 // loop_footer
      %s18 = sadd.s32 1, %s14
    $region7: #{_mlp_forward_impl.1} parent=1 // loop_footer_branch
      %13 = sbr.rel target = $region3
    $region8: #{_mlp_forward_impl.1} parent=1 // loop_exit
      _
    %441 = vsyncpa [#allocation3], 1
    %s442 = scalar_lea.sflag [#allocation3], 1
    %443 = vsyncpa %s442, 1

</llo_original>
